<compile_context>
chip_gen: v5e
topology: v5e:2x2
jax: 0.10.0
libtpu: 0.0.40
codegen_flags: <defaults>
</compile_context>

<pallas_src>
import functools

import jax
import jax.numpy as jnp
from jax.experimental import pallas as pl
from jax.experimental.pallas import tpu as pltpu


def _pixel_shuffle_kernel(m_ref, x_ref, y_ref, *, scale, compute_dtype):
    """One grid step = one (batch, output-channel-group) pair.

    m_ref: (s*s, H*W, H*s*W*s)  resident 0/1 scatter matrices (VMEM)
    x_ref: (1, s**3, D, H*W)    all s^3 source channels, all depths
    y_ref: (1, 1, D, s, H*s*W*s) lane-dense output slab
    """
    s = scale
    D = x_ref.shape[2]
    HsWs = m_ref.shape[2]

    for sd in range(s):                              # static unroll (s is small)
        acc = jnp.zeros((D, HsWs), jnp.float32)
        for j in range(s * s):                       # static unroll
            xj = x_ref[0, sd * s * s + j, :, :].astype(compute_dtype)  # (D, H*W)
            acc = acc + jnp.dot(xj, m_ref[j, :, :],
                                preferred_element_type=jnp.float32)
        y_ref[0, 0, :, sd, :] = acc.astype(y_ref.dtype)


def pixel_shuffle_3d(x, scale):
    """Pallas TPU implementation of the PyTorch 3D PixelShuffle forward."""
    B, C, D, H, W = x.shape
    s = scale
    assert C % (s ** 3) == 0, "channels must be divisible by scale**3"
    nOut = C // (s ** 3)
    HW = H * W
    Hs, Ws = H * s, W * s
    HsWs = Hs * Ws

    # bf16 data stays bf16 (native MXU path, exact through 0/1 matrices);
    # everything else goes through the exact f32 path.
    compute_dtype = jnp.bfloat16 if x.dtype == jnp.bfloat16 else jnp.float32

    # Pure reshape on the input: last axis becomes h*W+w (contiguous).
    x2 = x.reshape(B, C, D, HW)

    # Precompute the 0/1 scatter matrices once (resident in VMEM):
    #   M[j, h*W+w, (h*s+sh)*W*s + w*s+sw] = 1  with j = sh*s + sw
    jj = jnp.arange(s * s)[:, None, None]            # (s*s, 1, 1)
    kk = jnp.arange(HW)[None, :, None]               # (1, HW, 1)
    cc = jnp.arange(HsWs)[None, None, :]             # (1, 1, HsWs)
    sh, sw = jj // s, jj % s
    h, w = kk // W, kk % W
    hh, ww = cc // Ws, cc % Ws
    M = ((hh == h * s + sh) & (ww == w * s + sw)).astype(compute_dtype)

    kernel = functools.partial(_pixel_shuffle_kernel, scale=s,
                               compute_dtype=compute_dtype)

    grid = (B, nOut)
    y = pl.pallas_call(
        kernel,
        out_shape=jax.ShapeDtypeStruct((B, nOut, D, s, HsWs), x.dtype),
        grid_spec=pltpu.PrefetchScalarGridSpec(
            num_scalar_prefetch=0,
            grid=grid,
            in_specs=[
                # Scatter matrices: constant block index -> DMA'd once, resident.
                pl.BlockSpec((s * s, HW, HsWs), lambda b, co: (0, 0, 0)),
                # All s^3 channels of group co, full depth, full H*W (contiguous).
                pl.BlockSpec((1, s ** 3, D, HW), lambda b, co: (b, co, 0, 0)),
            ],
            # Whole per-channel output slab, lane-dense last dim (H*s*W*s).
            out_specs=pl.BlockSpec((1, 1, D, s, HsWs),
                                   lambda b, co: (b, co, 0, 0, 0)),
        ),
        compiler_params=pltpu.CompilerParams(
            dimension_semantics=("parallel", "parallel"),
        ),
    )(M, x2)

    # Pure reshape: (D, s) merge in (d, sd) order and H*s*W*s splits contiguously.
    return y.reshape(B, nOut, D * s, Hs, Ws)


def pixel_shuffle_3d_ref(x, s):
    """Pure-JAX reference matching the PyTorch forward exactly."""
    B, C, D, H, W = x.shape
    nOut = C // (s ** 3)
    v = x.reshape(B, nOut, s, s, s, D, H, W)
    v = jnp.transpose(v, (0, 1, 5, 2, 6, 3, 7, 4))
    return v.reshape(B, nOut, D * s, H * s, W * s)


if __name__ == "__main__":
    scale = 2
    B, nOut, D, H, W = 2, 2, 4, 8, 8
    C = nOut * scale ** 3  # 16

    key = jax.random.PRNGKey(0)
    x = jax.random.normal(key, (B, C, D, H, W), dtype=jnp.float32)

    out = pixel_shuffle_3d(x, scale)
    out = jax.block_until_ready(out)

    ref = pixel_shuffle_3d_ref(x, scale)

    assert out.shape == (B, nOut, D * scale, H * scale, W * scale), out.shape
    assert out.dtype == x.dtype
    assert jnp.array_equal(out, ref), "mismatch vs reference"

    print("KERNEL_OK")
</pallas_src>

<mosaic_0001>
module attributes {stable_mosaic.version = 11 : i64} {
  func.func @_pixel_shuffle_kernel(%arg0: i32, %arg1: i32, %arg2: memref<4x64x256xf32, #tpu.memory_space<vmem>>, %arg3: memref<1x8x4x64xf32, #tpu.memory_space<vmem>>, %arg4: memref<1x1x4x2x256xf32, #tpu.memory_space<vmem>>) attributes {dimension_semantics = [#tpu.dimension_semantics<parallel>, #tpu.dimension_semantics<parallel>], iteration_bounds = array<i64: 2, 2>, scalar_prefetch = 0 : i64, scratch_operands = 0 : i64, tpu.core_type = #tpu.core_type<tc>, window_params = [{pipeline_mode = #tpu.pipeline_mode<synchronous>, transform_indices = @transform_0, window_bounds = array<i64: 4, 64, 256>}, {transform_indices = @transform_1, window_bounds = array<i64: 1, 8, 4, 64>}, {transform_indices = @transform_2, window_bounds = array<i64: 1, 1, 4, 2, 256>}]} {
    %cst = arith.constant 0.000000e+00 : f32
    %0 = vector.broadcast %cst : f32 to vector<4x256xf32>
    %c0 = arith.constant 0 : index
    %c0_0 = arith.constant 0 : index
    %c0_1 = arith.constant 0 : index
    %c0_2 = arith.constant 0 : index
    %1 = vector.load %arg3[%c0, %c0_0, %c0_1, %c0_2] : memref<1x8x4x64xf32, #tpu.memory_space<vmem>>, vector<1x1x4x64xf32>
    %2 = vector.shape_cast %1 : vector<1x1x4x64xf32> to vector<4x64xf32>
    %c0_3 = arith.constant 0 : index
    %c0_4 = arith.constant 0 : index
    %c0_5 = arith.constant 0 : index
    %3 = vector.load %arg2[%c0_3, %c0_4, %c0_5] : memref<4x64x256xf32, #tpu.memory_space<vmem>>, vector<1x64x256xf32>
    %4 = vector.shape_cast %3 : vector<1x64x256xf32> to vector<64x256xf32>
    %cst_6 = arith.constant dense<0.000000e+00> : vector<4x256xf32>
    %5 = tpu.matmul %2, %4, %cst_6 {dimension_numbers = #tpu.dot_dimension_numbers<[1], [0], [0], [1], [0, 0, 1, 1], [], []>} : vector<4x64xf32>, vector<64x256xf32>, vector<4x256xf32> -> vector<4x256xf32>
    %6 = arith.addf %0, %5 : vector<4x256xf32>
    %c0_7 = arith.constant 0 : index
    %c1 = arith.constant 1 : index
    %c0_8 = arith.constant 0 : index
    %c0_9 = arith.constant 0 : index
    %7 = vector.load %arg3[%c0_7, %c1, %c0_8, %c0_9] : memref<1x8x4x64xf32, #tpu.memory_space<vmem>>, vector<1x1x4x64xf32>
    %8 = vector.shape_cast %7 : vector<1x1x4x64xf32> to vector<4x64xf32>
    %c1_10 = arith.constant 1 : index
    %c0_11 = arith.constant 0 : index
    %c0_12 = arith.constant 0 : index
    %9 = vector.load %arg2[%c1_10, %c0_11, %c0_12] : memref<4x64x256xf32, #tpu.memory_space<vmem>>, vector<1x64x256xf32>
    %10 = vector.shape_cast %9 : vector<1x64x256xf32> to vector<64x256xf32>
    %cst_13 = arith.constant dense<0.000000e+00> : vector<4x256xf32>
    %11 = tpu.matmul %8, %10, %cst_13 {dimension_numbers = #tpu.dot_dimension_numbers<[1], [0], [0], [1], [0, 0, 1, 1], [], []>} : vector<4x64xf32>, vector<64x256xf32>, vector<4x256xf32> -> vector<4x256xf32>
    %12 = arith.addf %6, %11 : vector<4x256xf32>
    %c0_14 = arith.constant 0 : index
    %c2 = arith.constant 2 : index
    %c0_15 = arith.constant 0 : index
    %c0_16 = arith.constant 0 : index
    %13 = vector.load %arg3[%c0_14, %c2, %c0_15, %c0_16] : memref<1x8x4x64xf32, #tpu.memory_space<vmem>>, vector<1x1x4x64xf32>
    %14 = vector.shape_cast %13 : vector<1x1x4x64xf32> to vector<4x64xf32>
    %c2_17 = arith.constant 2 : index
    %c0_18 = arith.constant 0 : index
    %c0_19 = arith.constant 0 : index
    %15 = vector.load %arg2[%c2_17, %c0_18, %c0_19] : memref<4x64x256xf32, #tpu.memory_space<vmem>>, vector<1x64x256xf32>
    %16 = vector.shape_cast %15 : vector<1x64x256xf32> to vector<64x256xf32>
    %cst_20 = arith.constant dense<0.000000e+00> : vector<4x256xf32>
    %17 = tpu.matmul %14, %16, %cst_20 {dimension_numbers = #tpu.dot_dimension_numbers<[1], [0], [0], [1], [0, 0, 1, 1], [], []>} : vector<4x64xf32>, vector<64x256xf32>, vector<4x256xf32> -> vector<4x256xf32>
    %18 = arith.addf %12, %17 : vector<4x256xf32>
    %c0_21 = arith.constant 0 : index
    %c3 = arith.constant 3 : index
    %c0_22 = arith.constant 0 : index
    %c0_23 = arith.constant 0 : index
    %19 = vector.load %arg3[%c0_21, %c3, %c0_22, %c0_23] : memref<1x8x4x64xf32, #tpu.memory_space<vmem>>, vector<1x1x4x64xf32>
    %20 = vector.shape_cast %19 : vector<1x1x4x64xf32> to vector<4x64xf32>
    %c3_24 = arith.constant 3 : index
    %c0_25 = arith.constant 0 : index
    %c0_26 = arith.constant 0 : index
    %21 = vector.load %arg2[%c3_24, %c0_25, %c0_26] : memref<4x64x256xf32, #tpu.memory_space<vmem>>, vector<1x64x256xf32>
    %22 = vector.shape_cast %21 : vector<1x64x256xf32> to vector<64x256xf32>
    %cst_27 = arith.constant dense<0.000000e+00> : vector<4x256xf32>
    %23 = tpu.matmul %20, %22, %cst_27 {dimension_numbers = #tpu.dot_dimension_numbers<[1], [0], [0], [1], [0, 0, 1, 1], [], []>} : vector<4x64xf32>, vector<64x256xf32>, vector<4x256xf32> -> vector<4x256xf32>
    %24 = arith.addf %18, %23 : vector<4x256xf32>
    %c0_28 = arith.constant 0 : index
    %c0_29 = arith.constant 0 : index
    %c0_30 = arith.constant 0 : index
    %c0_31 = arith.constant 0 : index
    %c0_32 = arith.constant 0 : index
    %25 = vector.load %arg4[%c0_28, %c0_29, %c0_30, %c0_31, %c0_32] : memref<1x1x4x2x256xf32, #tpu.memory_space<vmem>>, vector<1x1x4x1x256xf32>
    %26 = vector.shape_cast %25 : vector<1x1x4x1x256xf32> to vector<4x256xf32>
    %27 = vector.shape_cast %24 : vector<4x256xf32> to vector<1x1x4x1x256xf32>
    tpu.vector_store %arg4[%c0_28, %c0_29, %c0_30, %c0_31, %c0_32], %27 {strides = array<i32>} : memref<1x1x4x2x256xf32, #tpu.memory_space<vmem>>, vector<1x1x4x1x256xf32>,
    %cst_33 = arith.constant 0.000000e+00 : f32
    %28 = vector.broadcast %cst_33 : f32 to vector<4x256xf32>
    %c0_34 = arith.constant 0 : index
    %c4 = arith.constant 4 : index
    %c0_35 = arith.constant 0 : index
    %c0_36 = arith.constant 0 : index
    %29 = vector.load %arg3[%c0_34, %c4, %c0_35, %c0_36] : memref<1x8x4x64xf32, #tpu.memory_space<vmem>>, vector<1x1x4x64xf32>
    %30 = vector.shape_cast %29 : vector<1x1x4x64xf32> to vector<4x64xf32>
    %c0_37 = arith.constant 0 : index
    %c0_38 = arith.constant 0 : index
    %c0_39 = arith.constant 0 : index
    %31 = vector.load %arg2[%c0_37, %c0_38, %c0_39] : memref<4x64x256xf32, #tpu.memory_space<vmem>>, vector<1x64x256xf32>
    %32 = vector.shape_cast %31 : vector<1x64x256xf32> to vector<64x256xf32>
    %cst_40 = arith.constant dense<0.000000e+00> : vector<4x256xf32>
    %33 = tpu.matmul %30, %32, %cst_40 {dimension_numbers = #tpu.dot_dimension_numbers<[1], [0], [0], [1], [0, 0, 1, 1], [], []>} : vector<4x64xf32>, vector<64x256xf32>, vector<4x256xf32> -> vector<4x256xf32>
    %34 = arith.addf %28, %33 : vector<4x256xf32>
    %c0_41 = arith.constant 0 : index
    %c5 = arith.constant 5 : index
    %c0_42 = arith.constant 0 : index
    %c0_43 = arith.constant 0 : index
    %35 = vector.load %arg3[%c0_41, %c5, %c0_42, %c0_43] : memref<1x8x4x64xf32, #tpu.memory_space<vmem>>, vector<1x1x4x64xf32>
    %36 = vector.shape_cast %35 : vector<1x1x4x64xf32> to vector<4x64xf32>
    %c1_44 = arith.constant 1 : index
    %c0_45 = arith.constant 0 : index
    %c0_46 = arith.constant 0 : index
    %37 = vector.load %arg2[%c1_44, %c0_45, %c0_46] : memref<4x64x256xf32, #tpu.memory_space<vmem>>, vector<1x64x256xf32>
    %38 = vector.shape_cast %37 : vector<1x64x256xf32> to vector<64x256xf32>
    %cst_47 = arith.constant dense<0.000000e+00> : vector<4x256xf32>
    %39 = tpu.matmul %36, %38, %cst_47 {dimension_numbers = #tpu.dot_dimension_numbers<[1], [0], [0], [1], [0, 0, 1, 1], [], []>} : vector<4x64xf32>, vector<64x256xf32>, vector<4x256xf32> -> vector<4x256xf32>
    %40 = arith.addf %34, %39 : vector<4x256xf32>
    %c0_48 = arith.constant 0 : index
    %c6 = arith.constant 6 : index
    %c0_49 = arith.constant 0 : index
    %c0_50 = arith.constant 0 : index
    %41 = vector.load %arg3[%c0_48, %c6, %c0_49, %c0_50] : memref<1x8x4x64xf32, #tpu.memory_space<vmem>>, vector<1x1x4x64xf32>
    %42 = vector.shape_cast %41 : vector<1x1x4x64xf32> to vector<4x64xf32>
    %c2_51 = arith.constant 2 : index
    %c0_52 = arith.constant 0 : index
    %c0_53 = arith.constant 0 : index
    %43 = vector.load %arg2[%c2_51, %c0_52, %c0_53] : memref<4x64x256xf32, #tpu.memory_space<vmem>>, vector<1x64x256xf32>
    %44 = vector.shape_cast %43 : vector<1x64x256xf32> to vector<64x256xf32>
    %cst_54 = arith.constant dense<0.000000e+00> : vector<4x256xf32>
    %45 = tpu.matmul %42, %44, %cst_54 {dimension_numbers = #tpu.dot_dimension_numbers<[1], [0], [0], [1], [0, 0, 1, 1], [], []>} : vector<4x64xf32>, vector<64x256xf32>, vector<4x256xf32> -> vector<4x256xf32>
    %46 = arith.addf %40, %45 : vector<4x256xf32>
    %c0_55 = arith.constant 0 : index
    %c7 = arith.constant 7 : index
    %c0_56 = arith.constant 0 : index
    %c0_57 = arith.constant 0 : index
    %47 = vector.load %arg3[%c0_55, %c7, %c0_56, %c0_57] : memref<1x8x4x64xf32, #tpu.memory_space<vmem>>, vector<1x1x4x64xf32>
    %48 = vector.shape_cast %47 : vector<1x1x4x64xf32> to vector<4x64xf32>
    %c3_58 = arith.constant 3 : index
    %c0_59 = arith.constant 0 : index
    %c0_60 = arith.constant 0 : index
    %49 = vector.load %arg2[%c3_58, %c0_59, %c0_60] : memref<4x64x256xf32, #tpu.memory_space<vmem>>, vector<1x64x256xf32>
    %50 = vector.shape_cast %49 : vector<1x64x256xf32> to vector<64x256xf32>
    %cst_61 = arith.constant dense<0.000000e+00> : vector<4x256xf32>
    %51 = tpu.matmul %48, %50, %cst_61 {dimension_numbers = #tpu.dot_dimension_numbers<[1], [0], [0], [1], [0, 0, 1, 1], [], []>} : vector<4x64xf32>, vector<64x256xf32>, vector<4x256xf32> -> vector<4x256xf32>
    %52 = arith.addf %46, %51 : vector<4x256xf32>
    %c0_62 = arith.constant 0 : index
    %c0_63 = arith.constant 0 : index
    %c0_64 = arith.constant 0 : index
    %c1_65 = arith.constant 1 : index
    %c0_66 = arith.constant 0 : index
    %53 = vector.load %arg4[%c0_62, %c0_63, %c0_64, %c1_65, %c0_66] : memref<1x1x4x2x256xf32, #tpu.memory_space<vmem>>, vector<1x1x4x1x256xf32>
    %54 = vector.shape_cast %53 : vector<1x1x4x1x256xf32> to vector<4x256xf32>
    %55 = vector.shape_cast %52 : vector<4x256xf32> to vector<1x1x4x1x256xf32>
    tpu.vector_store %arg4[%c0_62, %c0_63, %c0_64, %c1_65, %c0_66], %55 {strides = array<i32>} : memref<1x1x4x2x256xf32, #tpu.memory_space<vmem>>, vector<1x1x4x1x256xf32>,
    return
  }
  func.func @transform_0(%arg0: i32, %arg1: i32) -> (i32, i32, i32) {
    %c0_i32 = arith.constant 0 : i32
    %c0_i32_0 = arith.constant 0 : i32
    %c0_i32_1 = arith.constant 0 : i32
    %c0_i32_2 = arith.constant 0 : i32
    return %c0_i32, %c0_i32_0, %c0_i32_1 : i32, i32, i32
  }
  func.func @transform_1(%arg0: i32, %arg1: i32) -> (i32, i32, i32, i32) {
    %c0_i32 = arith.constant 0 : i32
    %c0_i32_0 = arith.constant 0 : i32
    %c0_i32_1 = arith.constant 0 : i32
    return %arg0, %arg1, %c0_i32, %c0_i32_0 : i32, i32, i32, i32
  }
  func.func @transform_2(%arg0: i32, %arg1: i32) -> (i32, i32, i32, i32, i32) {
    %c0_i32 = arith.constant 0 : i32
    %c0_i32_0 = arith.constant 0 : i32
    %c0_i32_1 = arith.constant 0 : i32
    %c0_i32_2 = arith.constant 0 : i32
    return %arg0, %arg1, %c0_i32, %c0_i32_0, %c0_i32_1 : i32, i32, i32, i32, i32
  }
}

</mosaic_0001>

<llo_original>
// kernel: tpu_custom_call.1
$region0: #{tpu_custom_call.1}
  #allocation0 [shape = 'u32[]', space=smem, size = 0x4, offset = 0x4, fixed_abs, tag = 'smem constant byte address 0x4 - core index']
  #allocation1 [shape = 'u32[72,128]{1,0:T(1,128)}', space=vmem, size = 0x9000, scoped, tag = 'internal scratch']
  %s0 = inlined_call_operand.hbm [shape: f32[4,64,256], index: 0, kind: input, shape index: {}]
  %s1 = inlined_call_operand.hbm [shape: f32[2,16,4,64], index: 1, kind: input, shape index: {}]
  %s2 = inlined_call_operand.hbm [shape: f32[2,2,4,2,256], index: 2, kind: output, shape index: {}]
  %s3 = sld [smem:[#allocation0]]
  $region49: #{tpu_custom_call.1} parent=0
    _
  %s5 = ssub.s32 1, %s3
  %s6 = scalar_select 0, %s5, %s3
  $region1: #{tpu_custom_call.1} parent=0
    #allocation2 [shape = 'u8[262144]{0}', space=vmem, size = 0x40000, scoped, tag = 'input window, operand 0, single buffered']
    #allocation3 [shape = 's32[2]{0}', space=sflag, size = 0x8, scoped, tag = 'scoped memory for tpu_custom_call.1']
    #allocation4 [shape = 's32[2]{0}', space=sflag, size = 0x8, scoped, tag = 'scoped memory for tpu_custom_call.1']
    #allocation5 [shape = 'u8[32768]{0}', space=vmem, size = 0x8000, scoped, tag = 'input window, operand 1']
    #allocation6 [shape = 's32[2]{0}', space=sflag, size = 0x8, scoped, tag = 'scoped memory for tpu_custom_call.1']
    #allocation7 [shape = 'u8[16384]{0}', space=vmem, size = 0x4000, scoped, tag = 'output window, operand 0']
    %7 = vsyncpa [#allocation3], 0
    %8 = vsyncpa [#allocation6], 0
    %s9 = scalar_lea.sflag [#allocation6], 1
    %10 = vsyncpa %s9, 0
    %11 = vsyncpa [#allocation4], 0
    %s12 = scalar_lea.sflag [#allocation4], 1
    %13 = vsyncpa %s12, 0
    loop: start=0, step=1, limit=6
    $region2: #{tpu_custom_call.1} parent=1 // loop_pre_header
      _
    $region3: #{tpu_custom_call.1} parent=1 // loop_header
      %s15 = sphi 0, %s19
      %p16 = scmp.ge.s32.totalorder %s15, 6
      %s22 = sphi 0, %s34
      %s23 = sphi 0, %s30
      %s24 = sphi 0, %s22
      %s25 = sphi 0, %s23
      %s26 = sphi 0, %s24
      %s27 = sphi 0, %s25
      %s35 = sphi 0, %s35
      %s37 = sphi 0, %s35
      %s38 = sphi 0, %s37
      %s52 = sphi 0, %s38
      %s60 = sphi 0, %s62
      %s63 = sphi 0, %s60
      %s64 = sphi 0, %s63
      %s80 = sphi 0, %s64
      %s88 = sphi 0, %s90
      %s91 = sphi 0, %s88
      %s92 = sphi 0, %s91
      %s108 = sphi 0, %s92
    $region4: #{tpu_custom_call.1} parent=1 // loop_header_branch
      %18 = sbr.rel (%p16) target = $region8
    $region5: #{tpu_custom_call.1} parent=1 // loop_body
      %s20 = ssub.s32 %s15, 1
      %s21 = ssub.s32 %s15, 2
      %s28 = sadd.s32 1, %s23
      %p29 = scmp.ge.s32.totalorder %s28, 2
      %s30 = scalar_select %p29, 0, %s28
      %s31 = sadd.s32 1, %s22
      %s32 = scalar_select %p29, %s31, %s22
      %p33 = scmp.ge.s32.totalorder %s32, 2
      %s34 = scalar_select %p33, 0, %s32
      %s36 = sadd.s32 %s35, 1
      %p39 = scmp.eq.s32.totalorder %s15, 3
      %p40 = scmp.ne.s32.totalorder %s35, %s37
      %p41 = scmp.eq.s32.totalorder %s15, 0
      %p42 = por %p40, %p41
      %p43 = scmp.ne.s32.totalorder %s35, %s37
      %p44 = scmp.eq.s32.totalorder %s20, 3
      %p45 = por %p43, %p44
      %p46 = scmp.ne.s32.totalorder %s37, %s38
      %p47 = scmp.eq.s32.totalorder %s20, 0
      %p48 = por %p46, %p47
      %p49 = scmp.ne.s32.totalorder %s37, %s38
      %p50 = scmp.eq.s32.totalorder %s21, 3
      %p51 = por %p49, %p50
      %p53 = scmp.ne.s32.totalorder %s38, %s52
      %p54 = scmp.eq.s32.totalorder %s21, 0
      %p55 = por %p53, %p54
      %s56 = ssub.s32 %s22, %s34
      %s57 = ssub.s32 %s23, %s30
      %s58 = sor.u32 %s56, %s57
      %p59 = scmp.eq.s32.totalorder %s58, 0
      %s61 = sadd.s32 %s60, 1
      %s62 = scalar_select %p59, %s60, %s61
      %p65 = pneg %p59
      %p66 = scmp.eq.s32.totalorder %s15, 3
      %p67 = por %p65, %p66
      %p68 = scmp.ne.s32.totalorder %s60, %s63
      %p69 = scmp.eq.s32.totalorder %s15, 0
      %p70 = por %p68, %p69
      %p71 = scmp.ne.s32.totalorder %s60, %s63
      %p72 = scmp.eq.s32.totalorder %s20, 3
      %p73 = por %p71, %p72
      %p74 = scmp.ne.s32.totalorder %s63, %s64
      %p75 = scmp.eq.s32.totalorder %s20, 0
      %p76 = por %p74, %p75
      %p77 = scmp.ne.s32.totalorder %s63, %s64
      %p78 = scmp.eq.s32.totalorder %s21, 3
      %p79 = por %p77, %p78
      %p81 = scmp.ne.s32.totalorder %s64, %s80
      %p82 = scmp.eq.s32.totalorder %s21, 0
      %p83 = por %p81, %p82
      %s84 = ssub.s32 %s22, %s34
      %s85 = ssub.s32 %s23, %s30
      %s86 = sor.u32 %s84, %s85
      %p87 = scmp.eq.s32.totalorder %s86, 0
      %s89 = sadd.s32 %s88, 1
      %s90 = scalar_select %p87, %s88, %s89
      %p93 = pneg %p87
      %p94 = scmp.eq.s32.totalorder %s15, 3
      %p95 = por %p93, %p94
      %p96 = scmp.ne.s32.totalorder %s88, %s91
      %p97 = scmp.eq.s32.totalorder %s15, 0
      %p98 = por %p96, %p97
      %p99 = scmp.ne.s32.totalorder %s88, %s91
      %p100 = scmp.eq.s32.totalorder %s20, 3
      %p101 = por %p99, %p100
      %p102 = scmp.ne.s32.totalorder %s91, %s92
      %p103 = scmp.eq.s32.totalorder %s20, 0
      %p104 = por %p102, %p103
      %p105 = scmp.ne.s32.totalorder %s91, %s92
      %p106 = scmp.eq.s32.totalorder %s21, 3
      %p107 = por %p105, %p106
      %p109 = scmp.ne.s32.totalorder %s92, %s108
      %p110 = scmp.eq.s32.totalorder %s21, 0
      %p111 = por %p109, %p110
      %p112 = scmp.le.s32.totalorder 1, %s15
      %p113 = scmp.lt.s32.totalorder %s15, 5
      %p114 = pnand %p112, %p113
      %p115 = pneg %p114
      // Predicated region
      $region9: #{tpu_custom_call.1} parent=5 // pred_check
        _
      $region10: #{tpu_custom_call.1} parent=5 // pred_check_branch
        %117 = sbr.rel (%p114) target = $region12
      $region11: #{tpu_custom_call.1} parent=5 // pred_region
        %s118 = ssub.s32 %s15, 1
        // Predicated region
        $region13: #{tpu_custom_call.1} parent=11 // pred_check
          %p119 = pneg %p48
        $region14: #{tpu_custom_call.1} parent=11 // pred_check_branch
          %121 = sbr.rel (%p119) target = $region16
        $region15: #{tpu_custom_call.1} parent=11 // pred_region
          %123 = vsyncadd [#allocation3], 0
          %s124 = sshll.u32 %s0, 4
          %s125 = int_to_ptr.hbm [resolvable:$true] %s124
          %s126 = sshll.u32 [#allocation2], 4
          %s127 = int_to_ptr.vmem [resolvable:$true] %s126
          %132 = dma.hbm_to_vmem [thread:$0]  %s125, 8192, %s127, [#allocation3], 256, 256, 16
        $region16: #{tpu_custom_call.1} parent=11 // pred_fallthru
          _
      $region12: #{tpu_custom_call.1} parent=5 // pred_fallthru
        _
      %p133 = scmp.lt.s32.totalorder %s15, 4
      // Predicated region
      $region17: #{tpu_custom_call.1} parent=5 // pred_check
        %p134 = pneg %p133
      $region18: #{tpu_custom_call.1} parent=5 // pred_check_branch
        %136 = sbr.rel (%p134) target = $region20
      $region19: #{tpu_custom_call.1} parent=5 // pred_region
        // Predicated region
        $region21: #{tpu_custom_call.1} parent=19 // pred_check
          %p137 = pneg %p70
        $region22: #{tpu_custom_call.1} parent=19 // pred_check_branch
          %139 = sbr.rel (%p137) target = $region24
        $region23: #{tpu_custom_call.1} parent=19 // pred_region
          %s140 = sand.u32 %s60, 1
          %s141 = scalar_lea.sflag [#allocation6], %s140
          %s142 = sand.u32 %s60, 1
          %s143 = smul.addr %s142, 32
          %s144 = scalar_lea.vmem [#allocation5], %s143
          %s145 = smul.u32 8, %s23
          %147 = vsyncadd %s141, 0
          %s148 = smul.addr %s22, 16
          %s149 = sadd.s32 %s145, %s148
          %s150 = smul.addr %s149, 4
          %s151 = scalar_lea.hbm %s1, %s150
          %s152 = sshll.u32 %s151, 4
          %s153 = int_to_ptr.hbm [resolvable:$true] %s152
          %s154 = sshll.u32 %s144, 4
          %s155 = int_to_ptr.vmem [resolvable:$true] %s154
          %160 = dma.hbm_to_vmem [thread:$0]  %s153, 512, %s155, %s141, 64, 64, 4
        $region24: #{tpu_custom_call.1} parent=19 // pred_fallthru
          _
      $region20: #{tpu_custom_call.1} parent=5 // pred_fallthru
        _
      %p161 = scmp.le.s32.totalorder 1, %s15
      %p162 = scmp.lt.s32.totalorder %s15, 5
      %p163 = pnand %p161, %p162
      %p164 = pneg %p163
      // Predicated region
      $region25: #{tpu_custom_call.1} parent=5 // pred_check
        _
      $region26: #{tpu_custom_call.1} parent=5 // pred_check_branch
        %166 = sbr.rel (%p163) target = $region28
      $region27: #{tpu_custom_call.1} parent=5 // pred_region
        %s167 = ssub.s32 %s15, 1
        // Predicated region
        $region29: #{tpu_custom_call.1} parent=27 // pred_check
          %p168 = pneg %p48
        $region30: #{tpu_custom_call.1} parent=27 // pred_check_branch
          %170 = sbr.rel (%p168) target = $region32
        $region31: #{tpu_custom_call.1} parent=27 // pred_region
          %172 = dma.done [#allocation3], 8192
        $region32: #{tpu_custom_call.1} parent=27 // pred_fallthru
          _
        %s173 = sand.u32 %s63, 1
        %s174 = scalar_lea.sflag [#allocation6], %s173
        %s175 = sand.u32 %s63, 1
        %s176 = smul.addr %s175, 32
        %s177 = scalar_lea.vmem [#allocation5], %s176
        // Predicated region
        $region33: #{tpu_custom_call.1} parent=27 // pred_check
          %p178 = pneg %p76
        $region34: #{tpu_custom_call.1} parent=27 // pred_check_branch
          %180 = sbr.rel (%p178) target = $region36
        $region35: #{tpu_custom_call.1} parent=27 // pred_region
          %182 = dma.done %s174, 512
        $region36: #{tpu_custom_call.1} parent=27 // pred_fallthru
          _
        %p183 = pneg %p48
        %p184 = pneg %p45
        %s185 = sand.u32 %s63, 1
        %s186 = scalar_lea.sflag [#allocation6], %s185
        %s187 = sand.u32 %s63, 1
        %s188 = smul.addr %s187, 32
        %s189 = scalar_lea.vmem [#allocation5], %s188
        %p190 = pneg %p76
        %p191 = pneg %p73
        %p192 = pneg %p104
        %p193 = pneg %p101
        %s194 = sand.u32 %s91, 1
        %s195 = scalar_lea.sflag [#allocation4], %s194
        %s196 = sand.u32 %s91, 1
        %s197 = smul.addr %s196, 16
        %s198 = scalar_lea.vmem [#allocation7], %s197
        %s199 = smul.u32 8, %s25
        %v200 = vld [vmem:[%s177] sm:$0xf]
        %v201 = vld [vmem:[#allocation2] sm:$0xff]
        %v202 = vld [vmem:[#allocation2 + $0x8] sm:$0xff]
        %v203 = vld [vmem:[#allocation2 + $0x10] sm:$0xff]
        %v204 = vld [vmem:[#allocation2 + $0x18] sm:$0xff]
        %v205 = vld [vmem:[#allocation2 + $0x20] sm:$0xff]
        %v206 = vld [vmem:[#allocation2 + $0x28] sm:$0xff]
        %v207 = vld [vmem:[#allocation2 + $0x30] sm:$0xff]
        %v208 = vld [vmem:[#allocation2 + $0x38] sm:$0xff]
        %v209 = vld [vmem:[#allocation2 + $0x40] sm:$0xff]
        %v210 = vld [vmem:[#allocation2 + $0x48] sm:$0xff]
        %v211 = vld [vmem:[#allocation2 + $0x50] sm:$0xff]
        %v212 = vld [vmem:[#allocation2 + $0x58] sm:$0xff]
        %v213 = vld [vmem:[#allocation2 + $0x60] sm:$0xff]
        %v214 = vld [vmem:[#allocation2 + $0x68] sm:$0xff]
        %v215 = vld [vmem:[#allocation2 + $0x70] sm:$0xff]
        %v216 = vld [vmem:[#allocation2 + $0x78] sm:$0xff]
        %s217 = scalar_lea.vmem %s177, 4 [#allocation5]
        %v218 = vld [vmem:[%s217] sm:$0xf]
        %s219 = scalar_lea.vmem [#allocation2], 128
        %v220 = vld [vmem:[%s219] sm:$0xff]
        %v221 = vld [vmem:[%s219 + $0x8] sm:$0xff]
        %v222 = vld [vmem:[%s219 + $0x10] sm:$0xff]
        %v223 = vld [vmem:[%s219 + $0x18] sm:$0xff]
        %v224 = vld [vmem:[%s219 + $0x20] sm:$0xff]
        %v225 = vld [vmem:[%s219 + $0x28] sm:$0xff]
        %v226 = vld [vmem:[%s219 + $0x30] sm:$0xff]
        %v227 = vld [vmem:[%s219 + $0x38] sm:$0xff]
        %v228 = vld [vmem:[%s219 + $0x40] sm:$0xff]
        %v229 = vld [vmem:[%s219 + $0x48] sm:$0xff]
        %v230 = vld [vmem:[%s219 + $0x50] sm:$0xff]
        %v231 = vld [vmem:[%s219 + $0x58] sm:$0xff]
        %v232 = vld [vmem:[%s219 + $0x60] sm:$0xff]
        %v233 = vld [vmem:[%s219 + $0x68] sm:$0xff]
        %v234 = vld [vmem:[%s219 + $0x70] sm:$0xff]
        %v235 = vld [vmem:[%s219 + $0x78] sm:$0xff]
        %vm236 = vcmask 523264
        %v238 = vsel %vm236, %v218, 0
        %240 = vmatpush.msra.mxu0 0.0
        %241 = vmatpush.msra.mxu0 0.0
        %242 = vmatpush.msra.mxu0 0.0
        %243 = vmatpush.msra.mxu0 0.0
        %244 = vmatpush.msra.mxu0 0.0
        %245 = vmatpush.msra.mxu0 0.0
        %246 = vmatpush.msra.mxu0 0.0
        %247 = vmatpush.msra.mxu0 0.0
        %248 = vmatpush.msra.mxu0 %v234
        %249 = vmatpush.msra.mxu0 %v232
        %250 = vmatpush.msra.mxu0 %v230
        %251 = vmatpush.msra.mxu0 %v228
        %252 = vmatpush.msra.mxu0 %v226
        %253 = vmatpush.msra.mxu0 %v224
        %254 = vmatpush.msra.mxu0 %v222
        %255 = vmatpush.msra.mxu0 %v220
        %256 = vmatmul.f32.gmra.mxu0 %v238
        %v257 = vpop.f32.mrf.mxu0
        %v258 = vadd.f32 0.0, %v257
        %259 = vdwg.mxu0
        %260 = vmatpush.msra.mxu0 0.0
        %261 = vmatpush.msra.mxu0 0.0
        %262 = vmatpush.msra.mxu0 0.0
        %263 = vmatpush.msra.mxu0 0.0
        %264 = vmatpush.msra.mxu0 0.0
        %265 = vmatpush.msra.mxu0 0.0
        %266 = vmatpush.msra.mxu0 0.0
        %267 = vmatpush.msra.mxu0 0.0
        %268 = vmatpush.msra.mxu0 %v235
        %269 = vmatpush.msra.mxu0 %v233
        %270 = vmatpush.msra.mxu0 %v231
        %271 = vmatpush.msra.mxu0 %v229
        %272 = vmatpush.msra.mxu0 %v227
        %273 = vmatpush.msra.mxu0 %v225
        %274 = vmatpush.msra.mxu0 %v223
        %275 = vmatpush.msra.mxu0 %v221
        %276 = vmatmul.f32.gmra.mxu0 %v238
        %v277 = vpop.f32.mrf.mxu0
        %v278 = vadd.f32 0.0, %v277
        %279 = vdwg.mxu0
        %v281 = vsel %vm236, %v200, 0
        %283 = vmatpush.msra.mxu0 0.0
        %284 = vmatpush.msra.mxu0 0.0
        %285 = vmatpush.msra.mxu0 0.0
        %286 = vmatpush.msra.mxu0 0.0
        %287 = vmatpush.msra.mxu0 0.0
        %288 = vmatpush.msra.mxu0 0.0
        %289 = vmatpush.msra.mxu0 0.0
        %290 = vmatpush.msra.mxu0 0.0
        %291 = vmatpush.msra.mxu0 %v215
        %292 = vmatpush.msra.mxu0 %v213
        %293 = vmatpush.msra.mxu0 %v211
        %294 = vmatpush.msra.mxu0 %v209
        %295 = vmatpush.msra.mxu0 %v207
        %296 = vmatpush.msra.mxu0 %v205
        %297 = vmatpush.msra.mxu0 %v203
        %298 = vmatpush.msra.mxu0 %v201
        %299 = vmatmul.f32.gmra.mxu0 %v281
        %v300 = vpop.f32.mrf.mxu0
        %v301 = vadd.f32 %v258, %v300
        %302 = vdwg.mxu0
        %303 = vmatpush.msra.mxu0 0.0
        %304 = vmatpush.msra.mxu0 0.0
        %305 = vmatpush.msra.mxu0 0.0
        %306 = vmatpush.msra.mxu0 0.0
        %307 = vmatpush.msra.mxu0 0.0
        %308 = vmatpush.msra.mxu0 0.0
        %309 = vmatpush.msra.mxu0 0.0
        %310 = vmatpush.msra.mxu0 0.0
        %311 = vmatpush.msra.mxu0 %v216
        %312 = vmatpush.msra.mxu0 %v214
        %313 = vmatpush.msra.mxu0 %v212
        %314 = vmatpush.msra.mxu0 %v210
        %315 = vmatpush.msra.mxu0 %v208
        %316 = vmatpush.msra.mxu0 %v206
        %317 = vmatpush.msra.mxu0 %v204
        %318 = vmatpush.msra.mxu0 %v202
        %319 = vmatmul.f32.gmra.mxu0 %v281
        %v320 = vpop.f32.mrf.mxu0
        %v321 = vadd.f32 %v278, %v320
        %322 = vdwg.mxu0
        %s323 = scalar_lea.vmem %s177, 8 [#allocation5]
        %v324 = vld [vmem:[%s323] sm:$0xf]
        %s325 = scalar_lea.vmem [#allocation2], 256
        %v326 = vld [vmem:[%s325] sm:$0xff]
        %v327 = vld [vmem:[%s325 + $0x8] sm:$0xff]
        %v328 = vld [vmem:[%s325 + $0x10] sm:$0xff]
        %v329 = vld [vmem:[%s325 + $0x18] sm:$0xff]
        %v330 = vld [vmem:[%s325 + $0x20] sm:$0xff]
        %v331 = vld [vmem:[%s325 + $0x28] sm:$0xff]
        %v332 = vld [vmem:[%s325 + $0x30] sm:$0xff]
        %v333 = vld [vmem:[%s325 + $0x38] sm:$0xff]
        %v334 = vld [vmem:[%s325 + $0x40] sm:$0xff]
        %v335 = vld [vmem:[%s325 + $0x48] sm:$0xff]
        %v336 = vld [vmem:[%s325 + $0x50] sm:$0xff]
        %v337 = vld [vmem:[%s325 + $0x58] sm:$0xff]
        %v338 = vld [vmem:[%s325 + $0x60] sm:$0xff]
        %v339 = vld [vmem:[%s325 + $0x68] sm:$0xff]
        %v340 = vld [vmem:[%s325 + $0x70] sm:$0xff]
        %v341 = vld [vmem:[%s325 + $0x78] sm:$0xff]
        %v343 = vsel %vm236, %v324, 0
        %345 = vmatpush.msra.mxu0 0.0
        %346 = vmatpush.msra.mxu0 0.0
        %347 = vmatpush.msra.mxu0 0.0
        %348 = vmatpush.msra.mxu0 0.0
        %349 = vmatpush.msra.mxu0 0.0
        %350 = vmatpush.msra.mxu0 0.0
        %351 = vmatpush.msra.mxu0 0.0
        %352 = vmatpush.msra.mxu0 0.0
        %353 = vmatpush.msra.mxu0 %v340
        %354 = vmatpush.msra.mxu0 %v338
        %355 = vmatpush.msra.mxu0 %v336
        %356 = vmatpush.msra.mxu0 %v334
        %357 = vmatpush.msra.mxu0 %v332
        %358 = vmatpush.msra.mxu0 %v330
        %359 = vmatpush.msra.mxu0 %v328
        %360 = vmatpush.msra.mxu0 %v326
        %361 = vmatmul.f32.gmra.mxu0 %v343
        %v362 = vpop.f32.mrf.mxu0
        %v363 = vadd.f32 0.0, %v362
        %364 = vdwg.mxu0
        %365 = vmatpush.msra.mxu0 0.0
        %366 = vmatpush.msra.mxu0 0.0
        %367 = vmatpush.msra.mxu0 0.0
        %368 = vmatpush.msra.mxu0 0.0
        %369 = vmatpush.msra.mxu0 0.0
        %370 = vmatpush.msra.mxu0 0.0
        %371 = vmatpush.msra.mxu0 0.0
        %372 = vmatpush.msra.mxu0 0.0
        %373 = vmatpush.msra.mxu0 %v341
        %374 = vmatpush.msra.mxu0 %v339
        %375 = vmatpush.msra.mxu0 %v337
        %376 = vmatpush.msra.mxu0 %v335
        %377 = vmatpush.msra.mxu0 %v333
        %378 = vmatpush.msra.mxu0 %v331
        %379 = vmatpush.msra.mxu0 %v329
        %380 = vmatpush.msra.mxu0 %v327
        %381 = vmatmul.f32.gmra.mxu0 %v343
        %v382 = vpop.f32.mrf.mxu0
        %v383 = vadd.f32 0.0, %v382
        %384 = vdwg.mxu0
        %v385 = vadd.f32 %v301, %v363
        %v386 = vadd.f32 %v321, %v383
        %s387 = scalar_lea.vmem %s177, 12 [#allocation5]
        %v388 = vld [vmem:[%s387] sm:$0xf]
        %s389 = scalar_lea.vmem [#allocation2], 384
        %v390 = vld [vmem:[%s389] sm:$0xff]
        %v391 = vld [vmem:[%s389 + $0x8] sm:$0xff]
        %v392 = vld [vmem:[%s389 + $0x10] sm:$0xff]
        %v393 = vld [vmem:[%s389 + $0x18] sm:$0xff]
        %v394 = vld [vmem:[%s389 + $0x20] sm:$0xff]
        %v395 = vld [vmem:[%s389 + $0x28] sm:$0xff]
        %v396 = vld [vmem:[%s389 + $0x30] sm:$0xff]
        %v397 = vld [vmem:[%s389 + $0x38] sm:$0xff]
        %v398 = vld [vmem:[%s389 + $0x40] sm:$0xff]
        %v399 = vld [vmem:[%s389 + $0x48] sm:$0xff]
        %v400 = vld [vmem:[%s389 + $0x50] sm:$0xff]
        %v401 = vld [vmem:[%s389 + $0x58] sm:$0xff]
        %v402 = vld [vmem:[%s389 + $0x60] sm:$0xff]
        %v403 = vld [vmem:[%s389 + $0x68] sm:$0xff]
        %v404 = vld [vmem:[%s389 + $0x70] sm:$0xff]
        %v405 = vld [vmem:[%s389 + $0x78] sm:$0xff]
        %v407 = vsel %vm236, %v388, 0
        %409 = vmatpush.msra.mxu0 0.0
        %410 = vmatpush.msra.mxu0 0.0
        %411 = vmatpush.msra.mxu0 0.0
        %412 = vmatpush.msra.mxu0 0.0
        %413 = vmatpush.msra.mxu0 0.0
        %414 = vmatpush.msra.mxu0 0.0
        %415 = vmatpush.msra.mxu0 0.0
        %416 = vmatpush.msra.mxu0 0.0
        %417 = vmatpush.msra.mxu0 %v404
        %418 = vmatpush.msra.mxu0 %v402
        %419 = vmatpush.msra.mxu0 %v400
        %420 = vmatpush.msra.mxu0 %v398
        %421 = vmatpush.msra.mxu0 %v396
        %422 = vmatpush.msra.mxu0 %v394
        %423 = vmatpush.msra.mxu0 %v392
        %424 = vmatpush.msra.mxu0 %v390
        %425 = vmatmul.f32.gmra.mxu0 %v407
        %v426 = vpop.f32.mrf.mxu0
        %v427 = vadd.f32 0.0, %v426
        %428 = vdwg.mxu0
        %429 = vmatpush.msra.mxu0 0.0
        %430 = vmatpush.msra.mxu0 0.0
        %431 = vmatpush.msra.mxu0 0.0
        %432 = vmatpush.msra.mxu0 0.0
        %433 = vmatpush.msra.mxu0 0.0
        %434 = vmatpush.msra.mxu0 0.0
        %435 = vmatpush.msra.mxu0 0.0
        %436 = vmatpush.msra.mxu0 0.0
        %437 = vmatpush.msra.mxu0 %v405
        %438 = vmatpush.msra.mxu0 %v403
        %439 = vmatpush.msra.mxu0 %v401
        %440 = vmatpush.msra.mxu0 %v399
        %441 = vmatpush.msra.mxu0 %v397
        %442 = vmatpush.msra.mxu0 %v395
        %443 = vmatpush.msra.mxu0 %v393
        %444 = vmatpush.msra.mxu0 %v391
        %445 = vmatmul.f32.gmra.mxu0 %v407
        %v446 = vpop.f32.mrf.mxu0
        %v447 = vadd.f32 0.0, %v446
        %448 = vdwg.mxu0
        %v449 = vadd.f32 %v385, %v427
        %v450 = vadd.f32 %v386, %v447
        %v453 = vrot.slane %v450, 7
        %vm454 = vcmask 1040384
        %v455 = vsel %vm454, %v449, %v453
        %vm456 = vcmask 1041409
        %v457 = vsel %vm456, %v449, %v453
        %v458 = vrot.slane %v457, 1
        %vm459 = vcmask 1042434
        %v460 = vsel %vm459, %v449, %v453
        %v461 = vrot.slane %v460, 2
        %vm462 = vcmask 1043459
        %v463 = vsel %vm462, %v449, %v453
        %v464 = vrot.slane %v463, 3
        %v469 = vlaneseq
        %vm470 = vcmp.ge.s32.totalorder %v469, 0
        %vm471 = vcmp.lt.s32.totalorder %v469, 256
        %vm472 = vmand %vm470, %vm471
        %473 = vst.msk [vmem:[%s198] ss:$2 sm:$0x3] %vm472, %v455
        %s474 = scalar_lea.vmem %s198, 4 [#allocation7]
        %475 = vst.msk [vmem:[%s474] ss:$2 sm:$0x3] %vm472, %v458
        %s476 = scalar_lea.vmem %s198, 8 [#allocation7]
        %477 = vst.msk [vmem:[%s476] ss:$2 sm:$0x3] %vm472, %v461
        %s478 = scalar_lea.vmem %s198, 12 [#allocation7]
        %479 = vst.msk [vmem:[%s478] ss:$2 sm:$0x3] %vm472, %v464
        %s480 = scalar_lea.vmem %s177, 16 [#allocation5]
        %v481 = vld [vmem:[%s480] sm:$0xf]
        %v482 = vld [vmem:[#allocation2] sm:$0xff]
        %v483 = vld [vmem:[#allocation2 + $0x8] sm:$0xff]
        %v484 = vld [vmem:[#allocation2 + $0x10] sm:$0xff]
        %v485 = vld [vmem:[#allocation2 + $0x18] sm:$0xff]
        %v486 = vld [vmem:[#allocation2 + $0x20] sm:$0xff]
        %v487 = vld [vmem:[#allocation2 + $0x28] sm:$0xff]
        %v488 = vld [vmem:[#allocation2 + $0x30] sm:$0xff]
        %v489 = vld [vmem:[#allocation2 + $0x38] sm:$0xff]
        %v490 = vld [vmem:[#allocation2 + $0x40] sm:$0xff]
        %v491 = vld [vmem:[#allocation2 + $0x48] sm:$0xff]
        %v492 = vld [vmem:[#allocation2 + $0x50] sm:$0xff]
        %v493 = vld [vmem:[#allocation2 + $0x58] sm:$0xff]
        %v494 = vld [vmem:[#allocation2 + $0x60] sm:$0xff]
        %v495 = vld [vmem:[#allocation2 + $0x68] sm:$0xff]
        %v496 = vld [vmem:[#allocation2 + $0x70] sm:$0xff]
        %v497 = vld [vmem:[#allocation2 + $0x78] sm:$0xff]
        %s498 = scalar_lea.vmem %s177, 20 [#allocation5]
        %v499 = vld [vmem:[%s498] sm:$0xf]
        %v500 = vld [vmem:[%s219] sm:$0xff]
        %v501 = vld [vmem:[%s219 + $0x8] sm:$0xff]
        %v502 = vld [vmem:[%s219 + $0x10] sm:$0xff]
        %v503 = vld [vmem:[%s219 + $0x18] sm:$0xff]
        %v504 = vld [vmem:[%s219 + $0x20] sm:$0xff]
        %v505 = vld [vmem:[%s219 + $0x28] sm:$0xff]
        %v506 = vld [vmem:[%s219 + $0x30] sm:$0xff]
        %v507 = vld [vmem:[%s219 + $0x38] sm:$0xff]
        %v508 = vld [vmem:[%s219 + $0x40] sm:$0xff]
        %v509 = vld [vmem:[%s219 + $0x48] sm:$0xff]
        %v510 = vld [vmem:[%s219 + $0x50] sm:$0xff]
        %v511 = vld [vmem:[%s219 + $0x58] sm:$0xff]
        %v512 = vld [vmem:[%s219 + $0x60] sm:$0xff]
        %v513 = vld [vmem:[%s219 + $0x68] sm:$0xff]
        %v514 = vld [vmem:[%s219 + $0x70] sm:$0xff]
        %v515 = vld [vmem:[%s219 + $0x78] sm:$0xff]
        %v517 = vsel %vm236, %v499, 0
        %519 = vmatpush.msra.mxu0 0.0
        %520 = vmatpush.msra.mxu0 0.0
        %521 = vmatpush.msra.mxu0 0.0
        %522 = vmatpush.msra.mxu0 0.0
        %523 = vmatpush.msra.mxu0 0.0
        %524 = vmatpush.msra.mxu0 0.0
        %525 = vmatpush.msra.mxu0 0.0
        %526 = vmatpush.msra.mxu0 0.0
        %527 = vmatpush.msra.mxu0 %v514
        %528 = vmatpush.msra.mxu0 %v512
        %529 = vmatpush.msra.mxu0 %v510
        %530 = vmatpush.msra.mxu0 %v508
        %531 = vmatpush.msra.mxu0 %v506
        %532 = vmatpush.msra.mxu0 %v504
        %533 = vmatpush.msra.mxu0 %v502
        %534 = vmatpush.msra.mxu0 %v500
        %535 = vmatmul.f32.gmra.mxu0 %v517
        %v536 = vpop.f32.mrf.mxu0
        %v537 = vadd.f32 0.0, %v536
        %538 = vdwg.mxu0
        %539 = vmatpush.msra.mxu0 0.0
        %540 = vmatpush.msra.mxu0 0.0
        %541 = vmatpush.msra.mxu0 0.0
        %542 = vmatpush.msra.mxu0 0.0
        %543 = vmatpush.msra.mxu0 0.0
        %544 = vmatpush.msra.mxu0 0.0
        %545 = vmatpush.msra.mxu0 0.0
        %546 = vmatpush.msra.mxu0 0.0
        %547 = vmatpush.msra.mxu0 %v515
        %548 = vmatpush.msra.mxu0 %v513
        %549 = vmatpush.msra.mxu0 %v511
        %550 = vmatpush.msra.mxu0 %v509
        %551 = vmatpush.msra.mxu0 %v507
        %552 = vmatpush.msra.mxu0 %v505
        %553 = vmatpush.msra.mxu0 %v503
        %554 = vmatpush.msra.mxu0 %v501
        %555 = vmatmul.f32.gmra.mxu0 %v517
        %v556 = vpop.f32.mrf.mxu0
        %v557 = vadd.f32 0.0, %v556
        %558 = vdwg.mxu0
        %v560 = vsel %vm236, %v481, 0
        %562 = vmatpush.msra.mxu0 0.0
        %563 = vmatpush.msra.mxu0 0.0
        %564 = vmatpush.msra.mxu0 0.0
        %565 = vmatpush.msra.mxu0 0.0
        %566 = vmatpush.msra.mxu0 0.0
        %567 = vmatpush.msra.mxu0 0.0
        %568 = vmatpush.msra.mxu0 0.0
        %569 = vmatpush.msra.mxu0 0.0
        %570 = vmatpush.msra.mxu0 %v496
        %571 = vmatpush.msra.mxu0 %v494
        %572 = vmatpush.msra.mxu0 %v492
        %573 = vmatpush.msra.mxu0 %v490
        %574 = vmatpush.msra.mxu0 %v488
        %575 = vmatpush.msra.mxu0 %v486
        %576 = vmatpush.msra.mxu0 %v484
        %577 = vmatpush.msra.mxu0 %v482
        %578 = vmatmul.f32.gmra.mxu0 %v560
        %v579 = vpop.f32.mrf.mxu0
        %v580 = vadd.f32 %v537, %v579
        %581 = vdwg.mxu0
        %582 = vmatpush.msra.mxu0 0.0
        %583 = vmatpush.msra.mxu0 0.0
        %584 = vmatpush.msra.mxu0 0.0
        %585 = vmatpush.msra.mxu0 0.0
        %586 = vmatpush.msra.mxu0 0.0
        %587 = vmatpush.msra.mxu0 0.0
        %588 = vmatpush.msra.mxu0 0.0
        %589 = vmatpush.msra.mxu0 0.0
        %590 = vmatpush.msra.mxu0 %v497
        %591 = vmatpush.msra.mxu0 %v495
        %592 = vmatpush.msra.mxu0 %v493
        %593 = vmatpush.msra.mxu0 %v491
        %594 = vmatpush.msra.mxu0 %v489
        %595 = vmatpush.msra.mxu0 %v487
        %596 = vmatpush.msra.mxu0 %v485
        %597 = vmatpush.msra.mxu0 %v483
        %598 = vmatmul.f32.gmra.mxu0 %v560
        %v599 = vpop.f32.mrf.mxu0
        %v600 = vadd.f32 %v557, %v599
        %601 = vdwg.mxu0
        %s602 = scalar_lea.vmem %s177, 24 [#allocation5]
        %v603 = vld [vmem:[%s602] sm:$0xf]
        %v604 = vld [vmem:[%s325] sm:$0xff]
        %v605 = vld [vmem:[%s325 + $0x8] sm:$0xff]
        %v606 = vld [vmem:[%s325 + $0x10] sm:$0xff]
        %v607 = vld [vmem:[%s325 + $0x18] sm:$0xff]
        %v608 = vld [vmem:[%s325 + $0x20] sm:$0xff]
        %v609 = vld [vmem:[%s325 + $0x28] sm:$0xff]
        %v610 = vld [vmem:[%s325 + $0x30] sm:$0xff]
        %v611 = vld [vmem:[%s325 + $0x38] sm:$0xff]
        %v612 = vld [vmem:[%s325 + $0x40] sm:$0xff]
        %v613 = vld [vmem:[%s325 + $0x48] sm:$0xff]
        %v614 = vld [vmem:[%s325 + $0x50] sm:$0xff]
        %v615 = vld [vmem:[%s325 + $0x58] sm:$0xff]
        %v616 = vld [vmem:[%s325 + $0x60] sm:$0xff]
        %v617 = vld [vmem:[%s325 + $0x68] sm:$0xff]
        %v618 = vld [vmem:[%s325 + $0x70] sm:$0xff]
        %v619 = vld [vmem:[%s325 + $0x78] sm:$0xff]
        %v621 = vsel %vm236, %v603, 0
        %623 = vmatpush.msra.mxu0 0.0
        %624 = vmatpush.msra.mxu0 0.0
        %625 = vmatpush.msra.mxu0 0.0
        %626 = vmatpush.msra.mxu0 0.0
        %627 = vmatpush.msra.mxu0 0.0
        %628 = vmatpush.msra.mxu0 0.0
        %629 = vmatpush.msra.mxu0 0.0
        %630 = vmatpush.msra.mxu0 0.0
        %631 = vmatpush.msra.mxu0 %v618
        %632 = vmatpush.msra.mxu0 %v616
        %633 = vmatpush.msra.mxu0 %v614
        %634 = vmatpush.msra.mxu0 %v612
        %635 = vmatpush.msra.mxu0 %v610
        %636 = vmatpush.msra.mxu0 %v608
        %637 = vmatpush.msra.mxu0 %v606
        %638 = vmatpush.msra.mxu0 %v604
        %639 = vmatmul.f32.gmra.mxu0 %v621
        %v640 = vpop.f32.mrf.mxu0
        %v641 = vadd.f32 0.0, %v640
        %642 = vdwg.mxu0
        %643 = vmatpush.msra.mxu0 0.0
        %644 = vmatpush.msra.mxu0 0.0
        %645 = vmatpush.msra.mxu0 0.0
        %646 = vmatpush.msra.mxu0 0.0
        %647 = vmatpush.msra.mxu0 0.0
        %648 = vmatpush.msra.mxu0 0.0
        %649 = vmatpush.msra.mxu0 0.0
        %650 = vmatpush.msra.mxu0 0.0
        %651 = vmatpush.msra.mxu0 %v619
        %652 = vmatpush.msra.mxu0 %v617
        %653 = vmatpush.msra.mxu0 %v615
        %654 = vmatpush.msra.mxu0 %v613
        %655 = vmatpush.msra.mxu0 %v611
        %656 = vmatpush.msra.mxu0 %v609
        %657 = vmatpush.msra.mxu0 %v607
        %658 = vmatpush.msra.mxu0 %v605
        %659 = vmatmul.f32.gmra.mxu0 %v621
        %v660 = vpop.f32.mrf.mxu0
        %v661 = vadd.f32 0.0, %v660
        %662 = vdwg.mxu0
        %v663 = vadd.f32 %v580, %v641
        %v664 = vadd.f32 %v600, %v661
        %s665 = scalar_lea.vmem %s177, 28 [#allocation5]
        %v666 = vld [vmem:[%s665] sm:$0xf]
        %v667 = vld [vmem:[%s389] sm:$0xff]
        %v668 = vld [vmem:[%s389 + $0x8] sm:$0xff]
        %v669 = vld [vmem:[%s389 + $0x10] sm:$0xff]
        %v670 = vld [vmem:[%s389 + $0x18] sm:$0xff]
        %v671 = vld [vmem:[%s389 + $0x20] sm:$0xff]
        %v672 = vld [vmem:[%s389 + $0x28] sm:$0xff]
        %v673 = vld [vmem:[%s389 + $0x30] sm:$0xff]
        %v674 = vld [vmem:[%s389 + $0x38] sm:$0xff]
        %v675 = vld [vmem:[%s389 + $0x40] sm:$0xff]
        %v676 = vld [vmem:[%s389 + $0x48] sm:$0xff]
        %v677 = vld [vmem:[%s389 + $0x50] sm:$0xff]
        %v678 = vld [vmem:[%s389 + $0x58] sm:$0xff]
        %v679 = vld [vmem:[%s389 + $0x60] sm:$0xff]
        %v680 = vld [vmem:[%s389 + $0x68] sm:$0xff]
        %v681 = vld [vmem:[%s389 + $0x70] sm:$0xff]
        %v682 = vld [vmem:[%s389 + $0x78] sm:$0xff]
        %v684 = vsel %vm236, %v666, 0
        %686 = vmatpush.msra.mxu0 0.0
        %687 = vmatpush.msra.mxu0 0.0
        %688 = vmatpush.msra.mxu0 0.0
        %689 = vmatpush.msra.mxu0 0.0
        %690 = vmatpush.msra.mxu0 0.0
        %691 = vmatpush.msra.mxu0 0.0
        %692 = vmatpush.msra.mxu0 0.0
        %693 = vmatpush.msra.mxu0 0.0
        %694 = vmatpush.msra.mxu0 %v681
        %695 = vmatpush.msra.mxu0 %v679
        %696 = vmatpush.msra.mxu0 %v677
        %697 = vmatpush.msra.mxu0 %v675
        %698 = vmatpush.msra.mxu0 %v673
        %699 = vmatpush.msra.mxu0 %v671
        %700 = vmatpush.msra.mxu0 %v669
        %701 = vmatpush.msra.mxu0 %v667
        %702 = vmatmul.f32.gmra.mxu0 %v684
        %v703 = vpop.f32.mrf.mxu0
        %v704 = vadd.f32 0.0, %v703
        %705 = vdwg.mxu0
        %706 = vmatpush.msra.mxu0 0.0
        %707 = vmatpush.msra.mxu0 0.0
        %708 = vmatpush.msra.mxu0 0.0
        %709 = vmatpush.msra.mxu0 0.0
        %710 = vmatpush.msra.mxu0 0.0
        %711 = vmatpush.msra.mxu0 0.0
        %712 = vmatpush.msra.mxu0 0.0
        %713 = vmatpush.msra.mxu0 0.0
        %714 = vmatpush.msra.mxu0 %v682
        %715 = vmatpush.msra.mxu0 %v680
        %716 = vmatpush.msra.mxu0 %v678
        %717 = vmatpush.msra.mxu0 %v676
        %718 = vmatpush.msra.mxu0 %v674
        %719 = vmatpush.msra.mxu0 %v672
        %720 = vmatpush.msra.mxu0 %v670
        %721 = vmatpush.msra.mxu0 %v668
        %722 = vmatmul.f32.gmra.mxu0 %v684
        %v723 = vpop.f32.mrf.mxu0
        %v724 = vadd.f32 0.0, %v723
        %725 = vdwg.mxu0
        %v726 = vadd.f32 %v663, %v704
        %v727 = vadd.f32 %v664, %v724
        %v730 = vrot.slane %v727, 7
        %v731 = vsel %vm454, %v726, %v730
        %v732 = vsel %vm456, %v726, %v730
        %v733 = vrot.slane %v732, 1
        %v734 = vsel %vm459, %v726, %v730
        %v735 = vrot.slane %v734, 2
        %v736 = vsel %vm462, %v726, %v730
        %v737 = vrot.slane %v736, 3
        %s742 = scalar_lea.vmem %s198, 1 [#allocation7]
        %743 = vst.msk [vmem:[%s742] ss:$2 sm:$0x3] %vm472, %v731
        %s744 = scalar_lea.vmem %s198, 5 [#allocation7]
        %745 = vst.msk [vmem:[%s744] ss:$2 sm:$0x3] %vm472, %v733
        %s746 = scalar_lea.vmem %s198, 9 [#allocation7]
        %747 = vst.msk [vmem:[%s746] ss:$2 sm:$0x3] %vm472, %v735
        %s748 = scalar_lea.vmem %s198, 13 [#allocation7]
        %749 = vst.msk [vmem:[%s748] ss:$2 sm:$0x3] %vm472, %v737
        %s750 = sand.u32 %s91, 1
        %s751 = scalar_lea.sflag [#allocation4], %s750
        %s752 = sand.u32 %s91, 1
        %s753 = smul.addr %s752, 16
        %s754 = scalar_lea.vmem [#allocation7], %s753
        // Predicated region
        $region37: #{tpu_custom_call.1} parent=27 // pred_check
          %p755 = pneg %p101
        $region38: #{tpu_custom_call.1} parent=27 // pred_check_branch
          %757 = sbr.rel (%p755) target = $region40
        $region39: #{tpu_custom_call.1} parent=27 // pred_region
          %759 = vsyncadd %s751, 0
          %s760 = smul.addr %s25, 8
          %s761 = smul.addr %s24, 16
          %s762 = sadd.s32 %s760, %s761
          %s763 = smul.addr %s762, 2
          %s764 = scalar_lea.hbm %s2, %s763
          %s765 = sshll.u32 %s754, 4
          %s766 = int_to_ptr.vmem [resolvable:$true] %s765
          %s767 = sshll.u32 %s764, 4
          %s768 = int_to_ptr.hbm [resolvable:$true] %s767
          %773 = dma.vmem_to_hbm [thread:$0]  %s766, 256, %s768, %s751, 64, 64, 4
        $region40: #{tpu_custom_call.1} parent=27 // pred_fallthru
          _
      $region28: #{tpu_custom_call.1} parent=5 // pred_fallthru
        _
      %p774 = scmp.le.s32.totalorder 2, %s15
      // Predicated region
      $region41: #{tpu_custom_call.1} parent=5 // pred_check
        %p775 = pneg %p774
      $region42: #{tpu_custom_call.1} parent=5 // pred_check_branch
        %777 = sbr.rel (%p775) target = $region44
      $region43: #{tpu_custom_call.1} parent=5 // pred_region
        %s778 = ssub.s32 %s15, 2
        // Predicated region
        $region45: #{tpu_custom_call.1} parent=43 // pred_check
          %p779 = pneg %p107
        $region46: #{tpu_custom_call.1} parent=43 // pred_check_branch
          %781 = sbr.rel (%p779) target = $region48
        $region47: #{tpu_custom_call.1} parent=43 // pred_region
          %s782 = sand.u32 %s92, 1
          %s783 = scalar_lea.sflag [#allocation4], %s782
          %s784 = sand.u32 %s92, 1
          %s785 = smul.addr %s784, 16
          %s786 = scalar_lea.vmem [#allocation7], %s785
          %788 = dma.done %s783, 256
        $region48: #{tpu_custom_call.1} parent=43 // pred_fallthru
          _
      $region44: #{tpu_custom_call.1} parent=5 // pred_fallthru
        _
    $region6: #{tpu_custom_call.1} parent=1 // loop_footer
      %s19 = sadd.s32 1, %s15
    $region7: #{tpu_custom_call.1} parent=1 // loop_footer_branch
      %14 = sbr.rel target = $region3
    $region8: #{tpu_custom_call.1} parent=1 // loop_exit
      _
    %789 = vsyncpa [#allocation3], 1
    %s790 = scalar_lea.sflag [#allocation3], 1
    %791 = vsyncpa %s790, 1
    %792 = vsyncpa [#allocation6], 1
    %s793 = scalar_lea.sflag [#allocation6], 1
    %794 = vsyncpa %s793, 1
    %795 = vsyncpa [#allocation4], 1
    %s796 = scalar_lea.sflag [#allocation4], 1
    %797 = vsyncpa %s796, 1

</llo_original>
